<compile_context>
chip_gen: v7x
topology: tpu7x:2x2x1
jax: 0.10.0
libtpu: 0.0.40
codegen_flags: <defaults>
</compile_context>

<pallas_src>
import functools
import math

import jax
import jax.numpy as jnp
from jax import lax
from jax.experimental import pallas as pl
from jax.experimental.pallas import tpu as pltpu


def _ru(x, m):
    return ((x + m - 1) // m) * m


def _cdiv(a, b):
    return (a + b - 1) // b


def _choose_tile(dim, granule, tmax):
    """Largest tile (multiple of `granule`, <= tmax) minimizing the padded
    extent cdiv(dim, t) * t — tiles the real dim as tightly as possible."""
    hi = max(granule, min(tmax, _ru(dim, granule)))
    best_t, best_pad = granule, _cdiv(dim, granule) * granule
    for t in range(granule, hi + 1, granule):
        padded = _cdiv(dim, t) * t
        if padded <= best_pad:          # "<=" prefers the larger tile on ties
            best_t, best_pad = t, padded
    return best_t


# --------------------------------------------------------------------------
# Pallas kernel 1: fused matmul + bias + optional ReLU (1x1 convs / logits)
#   bf16 operands on the MXU, f32 accumulator scratch, f32 epilogue.
# --------------------------------------------------------------------------
def _mm_bias_act_kernel(w_ref, x_ref, b_ref, o_ref, acc_ref, *, relu):
    @pl.when(pl.program_id(2) == 0)
    def _():
        acc_ref[...] = jnp.zeros_like(acc_ref)

    acc_ref[...] += jnp.dot(w_ref[...], x_ref[...],
                            preferred_element_type=jnp.float32)

    @pl.when(pl.program_id(2) == pl.num_programs(2) - 1)
    def _():
        y = acc_ref[...] + b_ref[...]            # (tm,tn) + (tm,1), f32
        if relu:
            y = jnp.maximum(y, 0.0)
        o_ref[...] = y.astype(o_ref.dtype)


def matmul_bias_act(w, x, bias, relu, out_dtype=jnp.float32):
    """y = (relu)(w @ x + bias[:, None]);  w:[M,K], x:[K,N], bias:[M]."""
    M, K = w.shape
    K2, N = x.shape
    assert K == K2
    w = w.astype(jnp.bfloat16)
    x = x.astype(jnp.bfloat16)

    tm = _choose_tile(M, 16, 256)
    tn = _choose_tile(N, 128, 1024)
    tk = _ru(K, 16) if K <= 1024 else _choose_tile(K, 128, 1024)
    Mp, Np, Kp = _cdiv(M, tm) * tm, _cdiv(N, tn) * tn, _cdiv(K, tk) * tk

    wp = jnp.pad(w, ((0, Mp - M), (0, Kp - K)))
    xp = jnp.pad(x, ((0, Kp - K), (0, Np - N)))
    bp = jnp.pad(bias.astype(jnp.float32), (0, Mp - M))[:, None]    # (Mp, 1)

    gm, gn, gk = Mp // tm, Np // tn, Kp // tk
    if gm >= gn:
        grid = (gm, gn, gk)
        w_map = lambda i, j, k: (i, k)
        x_map = lambda i, j, k: (k, j)
        b_map = lambda i, j, k: (i, 0)
        o_map = lambda i, j, k: (i, j)
    else:
        # Put the larger (N) axis first so the leading "parallel" grid axis
        # has the most steps (keeps both v7x TensorCores busy).
        grid = (gn, gm, gk)
        w_map = lambda j, i, k: (i, k)
        x_map = lambda j, i, k: (k, j)
        b_map = lambda j, i, k: (i, 0)
        o_map = lambda j, i, k: (i, j)

    cost = pl.CostEstimate(flops=2 * Mp * Kp * Np, transcendentals=0,
                           bytes_accessed=2 * (Mp * Kp + Kp * Np + Mp * Np))

    out = pl.pallas_call(
        functools.partial(_mm_bias_act_kernel, relu=relu),
        out_shape=jax.ShapeDtypeStruct((Mp, Np), out_dtype),
        grid_spec=pltpu.PrefetchScalarGridSpec(
            num_scalar_prefetch=0,
            grid=grid,
            in_specs=[
                pl.BlockSpec((tm, tk), w_map),
                pl.BlockSpec((tk, tn), x_map),
                pl.BlockSpec((tm, 1), b_map),
            ],
            out_specs=pl.BlockSpec((tm, tn), o_map),
            scratch_shapes=[pltpu.VMEM((tm, tn), jnp.float32)],
        ),
        compiler_params=pltpu.CompilerParams(
            dimension_semantics=("parallel", "parallel", "arbitrary")),
        cost_estimate=cost,
    )(wp, xp, bp)
    return out[:M, :N] if (Mp != M or Np != N) else out


# --------------------------------------------------------------------------
# Pallas kernel 2: direct 3-D convolution (no HBM im2col).
#
# Activation stored as [B*Dp, Cin, P] where P flattens the SAME-padded (H, W)
# plane (P = Hp*Wp + slack).  Spatial taps (ih, iw) are static lane offsets
# ih*Wp + iw into the flat plane; they are copied into a K = taps*Cin VMEM
# scratch and contracted with one MXU matmul per temporal tap.  Temporal taps
# are the trailing "arbitrary" grid axis: the x index_map offsets the D-plane
# block by d*stride_d + t.  The output is written in padded-plane coordinates
# (Ho*Wp positions per (b, d)); the 2 right-pad columns per row are garbage
# and stripped by the caller (a cheap 1x copy vs. the removed 27x patches).
# --------------------------------------------------------------------------
def _direct_conv_kernel(w_ref, x_ref, b_ref, o_ref, acc_ref, *xcat,
                        offsets, nt, relu):
    t = pl.program_id(2)

    @pl.when(t == 0)
    def _():
        acc_ref[...] = jnp.zeros_like(acc_ref)

    if len(offsets) == 1:
        rhs = x_ref[0, :, offsets[0]:offsets[0] + nt]
    else:
        cin = x_ref.shape[1]
        xc = xcat[0]
        for idx, off in enumerate(offsets):
            xc[idx * cin:(idx + 1) * cin, :] = x_ref[0, :, off:off + nt]
        rhs = xc[...]

    acc_ref[...] += jnp.dot(w_ref[0], rhs, preferred_element_type=jnp.float32)

    @pl.when(t == pl.num_programs(2) - 1)
    def _():
        y = acc_ref[...] + b_ref[...]
        if relu:
            y = jnp.maximum(y, 0.0)
        o_ref[0] = y.astype(o_ref.dtype)


def _direct_conv(xflat, wmat, bias, *, B, Do, Dp_in, sd, kd, offsets, nt, relu,
                 out_dtype=jnp.bfloat16):
    """xflat: [B*Dp_in, Cin_eff, P]; wmat: [kd, Cout, K=len(offsets)*Cin_eff];
    bias: [Cout].  Returns [B*Do, Cout_padded, nt]."""
    nbd, cin_eff, P = xflat.shape
    kd2, cout, K = wmat.shape
    assert kd2 == kd and nbd == B * Dp_in and K == len(offsets) * cin_eff

    tm = _choose_tile(cout, 16, 256)
    Mp = _cdiv(cout, tm) * tm
    gi = Mp // tm
    wp = jnp.pad(wmat.astype(jnp.bfloat16), ((0, 0), (0, Mp - cout), (0, 0)))
    bp = jnp.pad(bias.astype(jnp.float32), (0, Mp - cout))[:, None]

    def x_map(bd, i, t):
        return ((bd // Do) * Dp_in + (bd % Do) * sd + t, 0, 0)

    scratch = [pltpu.VMEM((tm, nt), jnp.float32)]
    if len(offsets) > 1:
        scratch.append(pltpu.VMEM((K, nt), jnp.bfloat16))

    cost = pl.CostEstimate(
        flops=2 * B * Do * gi * kd * tm * K * nt, transcendentals=0,
        bytes_accessed=int(B * Do * gi * kd * (cin_eff * P + tm * K) * 2
                           + B * Do * Mp * nt * 2))

    out = pl.pallas_call(
        functools.partial(_direct_conv_kernel, offsets=tuple(offsets), nt=nt,
                          relu=relu),
        out_shape=jax.ShapeDtypeStruct((B * Do, Mp, nt), out_dtype),
        grid_spec=pltpu.PrefetchScalarGridSpec(
            num_scalar_prefetch=0,
            grid=(B * Do, gi, kd),
            in_specs=[
                pl.BlockSpec((1, tm, K), lambda bd, i, t: (t, i, 0)),
                pl.BlockSpec((1, cin_eff, P), x_map),
                pl.BlockSpec((tm, 1), lambda bd, i, t: (i, 0)),
            ],
            out_specs=pl.BlockSpec((1, tm, nt), lambda bd, i, t: (bd, i, 0)),
            scratch_shapes=scratch,
        ),
        compiler_params=pltpu.CompilerParams(
            dimension_semantics=("parallel", "parallel", "arbitrary")),
        cost_estimate=cost,
    )(wp, xflat.astype(jnp.bfloat16), bp)
    return out


def conv3x3x3_s1(x, p, relu=True, out_dtype=jnp.bfloat16):
    """Stride-1 SAME 3x3x3 Unit3D (conv + folded BN + ReLU), direct conv.
    x: [Cin, B, D, H, W] -> [Cout, B, D, H, W]."""
    Cin, B, D, H, W = x.shape
    cout = p["bias"].shape[0]
    cin_p = p["wmat"].shape[2] // 9              # cin padded to 16 at prep time
    Hp, Wp, Dp = H + 2, W + 2, D + 2
    nt = H * Wp                                  # outputs per (b, d), padded-plane coords
    P = _ru(Hp * Wp + 2, 128)                    # slack so the last tap never reads OOB

    xp = jnp.pad(x.astype(jnp.bfloat16),
                 ((0, cin_p - Cin), (0, 0), (1, 1), (1, 1), (1, 1)))
    xp = jnp.transpose(xp, (1, 2, 0, 3, 4)).reshape(B * Dp, cin_p, Hp * Wp)
    xp = jnp.pad(xp, ((0, 0), (0, 0), (0, P - Hp * Wp)))

    offsets = tuple(ih * Wp + iw for ih in range(3) for iw in range(3))
    y = _direct_conv(xp, p["wmat"], p["bias"], B=B, Do=D, Dp_in=Dp, sd=1, kd=3,
                     offsets=offsets, nt=nt, relu=relu, out_dtype=out_dtype)
    y = y[:, :cout, :].reshape(B, D, cout, H, Wp)[..., :W]   # strip pad columns
    return jnp.transpose(y, (2, 0, 1, 3, 4))                 # [Cout, B, D, H, W]


def conv7x7x7_s2_cin1(x, p, relu=True, out_dtype=jnp.bfloat16):
    """Conv3d_1a_7x7: 7x7x7 stride-2 SAME conv on a single input channel.
    Spatial (7x7) taps are im2col'ed (49x on 1 channel, cheap); temporal taps
    stay in the kernel grid, so no 343x patch tensor is built.
    x: [1, B, D, H, W] -> [64, B, Do, Ho, Wo]."""
    _, B, D, H, W = x.shape
    cout = p["bias"].shape[0]
    kd = p["wmat"].shape[0]
    pdb, pde, Do = _same_pad(D, 7, 2)
    phb, phe, Ho = _same_pad(H, 7, 2)
    pwb, pwe, Wo = _same_pad(W, 7, 2)
    Dp = D + pdb + pde
    xp = jnp.pad(x.astype(jnp.bfloat16),
                 ((0, 0), (0, 0), (pdb, pde), (phb, phe), (pwb, pwe)))
    slabs = [xp[0, :, :, ih: ih + 2 * Ho: 2, iw: iw + 2 * Wo: 2]
             for ih in range(7) for iw in range(7)]
    xs = jnp.stack(slabs, axis=2).reshape(B * Dp, 49, Ho * Wo)
    nt = Ho * Wo
    P = _ru(nt, 128)
    xs = jnp.pad(xs, ((0, 0), (0, 0), (0, P - nt)))
    y = _direct_conv(xs, p["wmat"], p["bias"], B=B, Do=Do, Dp_in=Dp, sd=2,
                     kd=kd, offsets=(0,), nt=nt, relu=relu, out_dtype=out_dtype)
    y = y[:, :cout, :].reshape(B, Do, cout, Ho, Wo)
    return jnp.transpose(y, (2, 0, 1, 3, 4))


def conv1x1(x, p, relu=True, out_dtype=jnp.bfloat16):
    """1x1x1 Unit3D via the fused matmul kernel.  x: [C, B, D, H, W]."""
    C, B, D, H, W = x.shape
    y = matmul_bias_act(p["wmat"], x.reshape(C, B * D * H * W), p["bias"],
                        relu=relu, out_dtype=out_dtype)
    return y.reshape(p["wmat"].shape[0], B, D, H, W)


# --------------------------------------------------------------------------
# Pallas kernel 3: pooling window-reduce (max / mean over a leading k axis)
# --------------------------------------------------------------------------
def _window_reduce_kernel(p_ref, o_ref, *, op):
    x = p_ref[...]
    if op == "max":
        r = jnp.max(x, axis=0)                 # max in the input dtype (bf16)
    else:                                      # mean (f32 accumulate)
        r = jnp.sum(x.astype(jnp.float32), axis=0) * (1.0 / x.shape[0])
    o_ref[...] = r.astype(o_ref.dtype)


def window_reduce(patches, op):
    """patches: [k, C, N] -> [C, N]  (max/mean over k)."""
    kvol, C, N = patches.shape
    tc = _choose_tile(C, 8, 64)
    tn = _choose_tile(N, 128, 1024)
    Cp, Np = _cdiv(C, tc) * tc, _cdiv(N, tn) * tn
    pp = jnp.pad(patches, ((0, 0), (0, Cp - C), (0, Np - N)))

    gc, gn = Cp // tc, Np // tn
    if gc >= gn:
        grid = (gc, gn)
        imap = lambda i, j: (0, i, j)
        omap = lambda i, j: (i, j)
    else:
        grid = (gn, gc)
        imap = lambda j, i: (0, i, j)
        omap = lambda j, i: (i, j)

    out = pl.pallas_call(
        functools.partial(_window_reduce_kernel, op=op),
        out_shape=jax.ShapeDtypeStruct((Cp, Np), patches.dtype),
        grid_spec=pltpu.PrefetchScalarGridSpec(
            num_scalar_prefetch=0,
            grid=grid,
            in_specs=[pl.BlockSpec((kvol, tc, tn), imap)],
            out_specs=pl.BlockSpec((tc, tn), omap),
        ),
        compiler_params=pltpu.CompilerParams(
            dimension_semantics=("parallel", "parallel")),
        cost_estimate=pl.CostEstimate(flops=kvol * Cp * Np, transcendentals=0,
                                      bytes_accessed=2 * (kvol + 1) * Cp * Np),
    )(pp)
    return out[:C, :N] if (Cp != C or Np != N) else out


# --------------------------------------------------------------------------
# Glue: TF-"SAME" padding, separable pooling, valid-avg-pool patches
# --------------------------------------------------------------------------
def _same_pad(size, k, s):
    out = -(-size // s)
    pad = max((out - 1) * s + k - size, 0)
    return pad // 2, pad - pad // 2, out


def _valid_pad(size, k, s):
    return 0, 0, (size - k) // s + 1


def _pool1d_same(x, axis, k, s, op):
    """1-D SAME pool along `axis` of x [C, B, D, H, W] (zero padding)."""
    size = x.shape[axis]
    pb, pe, out = _same_pad(size, k, s)
    padcfg = [(0, 0)] * x.ndim
    padcfg[axis] = (pb, pe)
    xp = jnp.pad(x, padcfg)
    slabs = []
    for i in range(k):
        idx = [slice(None)] * x.ndim
        idx[axis] = slice(i, i + s * out, s)
        slabs.append(xp[tuple(idx)])
    patches = jnp.stack(slabs, axis=0)              # [k, C, B, D', H', W']
    shp = patches.shape
    red = window_reduce(patches.reshape(k, shp[1], -1), op)
    return red.reshape(shp[1:])


def maxpool3d_same(x, ksize, stride):
    """Separable SAME max pool: the 3-D window max equals composed 1-D maxes;
    avoids materializing the kvol-times patch tensor."""
    for ax, k, s in ((2, ksize[0], stride[0]),
                     (3, ksize[1], stride[1]),
                     (4, ksize[2], stride[2])):
        if k == 1 and s == 1:
            continue
        x = _pool1d_same(x, ax, k, s, "max")
    return x


def _extract_patches(x, ksize, stride, same):
    """x:[C,B,D,H,W] -> (patches [kvol, C, B*Do*Ho*Wo], (Do,Ho,Wo))."""
    C, B, D, H, W = x.shape
    kd, kh, kw = ksize
    sd, sh, sw = stride
    padfn = _same_pad if same else _valid_pad
    pdb, pde, Do = padfn(D, kd, sd)
    phb, phe, Ho = padfn(H, kh, sh)
    pwb, pwe, Wo = padfn(W, kw, sw)
    xp = jnp.pad(x, ((0, 0), (0, 0), (pdb, pde), (phb, phe), (pwb, pwe)))
    slabs = []
    for id_ in range(kd):
        for ih in range(kh):
            for iw in range(kw):
                s = xp[:, :, id_: id_ + sd * Do: sd,
                             ih: ih + sh * Ho: sh,
                             iw: iw + sw * Wo: sw]
                slabs.append(s.reshape(C, B * Do * Ho * Wo))
    return jnp.stack(slabs, axis=0), (Do, Ho, Wo)


def avgpool3d_valid(x, ksize):
    C, B = x.shape[0], x.shape[1]
    patches, (Do, Ho, Wo) = _extract_patches(x, ksize, (1, 1, 1), same=False)
    return window_reduce(patches, "mean").reshape(C, B, Do, Ho, Wo)


# --------------------------------------------------------------------------
# Parameters (deterministic random init; BN folded at prep time)
# --------------------------------------------------------------------------
_INCEPTION_CFG = [
    ("Mixed_3b", 192, (64, 96, 128, 16, 32, 32)),
    ("Mixed_3c", 256, (128, 128, 192, 32, 96, 64)),
    ("Mixed_4b", 480, (192, 96, 208, 16, 48, 64)),
    ("Mixed_4c", 512, (160, 112, 224, 24, 64, 64)),
    ("Mixed_4d", 512, (128, 128, 256, 24, 64, 64)),
    ("Mixed_4e", 512, (112, 144, 288, 32, 64, 64)),
    ("Mixed_4f", 528, (256, 160, 320, 32, 128, 128)),
    ("Mixed_5b", 832, (256, 160, 320, 32, 128, 128)),
    ("Mixed_5c", 832, (384, 192, 384, 48, 128, 128)),
]


def _init_unit3d(key, cin, cout, ksize, use_bn=True, use_bias=False):
    kw_, kb, kg, kbt, km, kv = jax.random.split(key, 6)
    fan_in = cin * ksize[0] * ksize[1] * ksize[2]
    w = jax.random.normal(kw_, (cout, cin) + tuple(ksize), jnp.float32)
    w = w * jnp.float32(math.sqrt(2.0 / fan_in))
    if use_bn:
        eps = 1e-3
        gamma = 1.0 + 0.1 * jax.random.normal(kg, (cout,), jnp.float32)
        beta = 0.1 * jax.random.normal(kbt, (cout,), jnp.float32)
        mean = 0.1 * jax.random.normal(km, (cout,), jnp.float32)
        var = 1.0 + 0.2 * jax.random.uniform(kv, (cout,), jnp.float32)
        scale = gamma * jax.lax.rsqrt(var + eps)
        bias = beta - mean * scale
    else:
        scale = jnp.ones((cout,), jnp.float32)
        bias = (0.01 * jax.random.normal(kb, (cout,), jnp.float32)
                if use_bias else jnp.zeros((cout,), jnp.float32))
    return {"w": w, "scale": scale, "bias": bias}


def init_depth_encoder_params(key, num_classes=400, in_channels=1):
    it = iter(jax.random.split(key, 4 + 6 * len(_INCEPTION_CFG) + 2))
    p = {}
    p["Conv3d_1a_7x7"] = _init_unit3d(next(it), in_channels, 64, (7, 7, 7))
    p["Conv3d_2b_1x1"] = _init_unit3d(next(it), 64, 64, (1, 1, 1))
    p["Conv3d_2c_3x3"] = _init_unit3d(next(it), 64, 192, (3, 3, 3))
    for name, cin, oc in _INCEPTION_CFG:
        p[name] = {
            "b0":  _init_unit3d(next(it), cin, oc[0], (1, 1, 1)),
            "b1a": _init_unit3d(next(it), cin, oc[1], (1, 1, 1)),
            "b1b": _init_unit3d(next(it), oc[1], oc[2], (3, 3, 3)),
            "b2a": _init_unit3d(next(it), cin, oc[3], (1, 1, 1)),
            "b2b": _init_unit3d(next(it), oc[3], oc[4], (3, 3, 3)),
            "b3b": _init_unit3d(next(it), cin, oc[5], (1, 1, 1)),
        }
    p["logits"] = _init_unit3d(next(it), 1024, num_classes, (1, 1, 1),
                               use_bn=False, use_bias=True)
    return p


def _prep_unit_1x1(u):
    """1x1x1 conv: fold BN scale, [cout, cin] bf16 + f32 bias."""
    cout, cin = u["w"].shape[0], u["w"].shape[1]
    wmat = u["w"].reshape(cout, cin) * u["scale"][:, None]
    return {"wmat": wmat.astype(jnp.bfloat16),
            "bias": u["bias"].astype(jnp.float32)}


def _prep_unit_3x3(u):
    """3x3x3 conv for the direct kernel: [kd=3, cout, 9*cin_p] (cin padded to
    a multiple of 16 so the in-kernel K-scratch stores stay aligned)."""
    cout, cin = u["w"].shape[0], u["w"].shape[1]
    cin_p = _ru(cin, 16)
    w = u["w"] * u["scale"][:, None, None, None, None]
    w = jnp.pad(w, ((0, 0), (0, cin_p - cin), (0, 0), (0, 0), (0, 0)))
    w = jnp.transpose(w, (2, 0, 3, 4, 1)).reshape(3, cout, 9 * cin_p)
    return {"wmat": w.astype(jnp.bfloat16),
            "bias": u["bias"].astype(jnp.float32)}


def _prep_unit_conv1a(u):
    """7x7x7 cin=1 conv: [kd=7, cout, 49] (spatial taps in K, kd in the grid)."""
    cout = u["w"].shape[0]
    kd, kh, kw = u["w"].shape[2:]
    w = (u["w"] * u["scale"][:, None, None, None, None])[:, 0]
    w = jnp.transpose(w, (1, 0, 2, 3)).reshape(kd, cout, kh * kw)
    return {"wmat": w.astype(jnp.bfloat16),
            "bias": u["bias"].astype(jnp.float32)}


def prepare_params(raw):
    prep = {}
    prep["Conv3d_1a_7x7"] = _prep_unit_conv1a(raw["Conv3d_1a_7x7"])
    prep["Conv3d_2b_1x1"] = _prep_unit_1x1(raw["Conv3d_2b_1x1"])
    prep["Conv3d_2c_3x3"] = _prep_unit_3x3(raw["Conv3d_2c_3x3"])
    for name, _, _ in _INCEPTION_CFG:
        r = raw[name]
        u0, u1a, u2a = (_prep_unit_1x1(r[k]) for k in ("b0", "b1a", "b2a"))
        prep[name] = {
            # b0 / b1a / b2a read the same input: fuse into one matmul.
            "b012": {"wmat": jnp.concatenate(
                         [u0["wmat"], u1a["wmat"], u2a["wmat"]], axis=0),
                     "bias": jnp.concatenate(
                         [u0["bias"], u1a["bias"], u2a["bias"]], axis=0)},
            "b1b": _prep_unit_3x3(r["b1b"]),
            "b2b": _prep_unit_3x3(r["b2b"]),
            "b3b": _prep_unit_1x1(r["b3b"]),
        }
    prep["logits"] = _prep_unit_1x1(raw["logits"])
    return prep


# --------------------------------------------------------------------------
# I3D forward
# --------------------------------------------------------------------------
def _inception_module(x, p, oc):
    oc0, oc1a, _, oc2a, _, _ = oc
    fused = conv1x1(x, p["b012"])                 # [oc0+oc1a+oc2a, B, D, H, W]
    b0 = fused[:oc0]
    b1 = conv3x3x3_s1(fused[oc0:oc0 + oc1a], p["b1b"])
    b2 = conv3x3x3_s1(fused[oc0 + oc1a:oc0 + oc1a + oc2a], p["b2b"])
    b3 = conv1x1(maxpool3d_same(x, (3, 3, 3), (1, 1, 1)), p["b3b"])
    return jnp.concatenate([b0, b1, b2, b3], axis=0)


def _i3d_forward(x, p):
    # x: [C=1, B, T, H, W]
    x = x.astype(jnp.bfloat16)
    x = conv7x7x7_s2_cin1(x, p["Conv3d_1a_7x7"])              # Conv3d_1a_7x7
    x = maxpool3d_same(x, (1, 3, 3), (1, 2, 2))               # MaxPool3d_2a_3x3
    x = conv1x1(x, p["Conv3d_2b_1x1"])                        # Conv3d_2b_1x1
    x = conv3x3x3_s1(x, p["Conv3d_2c_3x3"])                   # Conv3d_2c_3x3
    x = maxpool3d_same(x, (1, 3, 3), (1, 2, 2))               # MaxPool3d_3a_3x3
    for name, _, oc in _INCEPTION_CFG[:2]:                    # Mixed_3b, Mixed_3c
        x = _inception_module(x, p[name], oc)
    x = maxpool3d_same(x, (3, 3, 3), (2, 2, 2))               # MaxPool3d_4a_3x3
    for name, _, oc in _INCEPTION_CFG[2:7]:                   # Mixed_4b..Mixed_4f
        x = _inception_module(x, p[name], oc)
    x = maxpool3d_same(x, (2, 2, 2), (2, 2, 2))               # MaxPool3d_5a_2x2
    for name, _, oc in _INCEPTION_CFG[7:]:                    # Mixed_5b, Mixed_5c
        x = _inception_module(x, p[name], oc)
    x = avgpool3d_valid(x, (2, 7, 7))                         # AvgPool3d((2,7,7))
    # dropout(0.5): identity in inference mode
    x = conv1x1(x, p["logits"], relu=False, out_dtype=jnp.float32)
    return x[:, :, :, 0, 0]                                   # [400, B, T']


def depth_encoder_forward(x, params):
    """DepthEncoder.forward: x [B, 1, T, H, W] (NCDHW) -> logits [B, 400, T']."""
    xin = jnp.transpose(x, (1, 0, 2, 3, 4))                   # [C=1, B, T, H, W]
    y = _i3d_forward(xin, params)                             # [400, B, T']
    return jnp.transpose(y, (1, 0, 2))


# --------------------------------------------------------------------------
if __name__ == "__main__":
    key = jax.random.PRNGKey(0)
    kp, kx, ks = jax.random.split(key, 3)

    # --- sanity check: matmul kernel -------------------------------------
    a = jax.random.normal(ks, (24, 72), jnp.float32)
    b = jax.random.normal(jax.random.fold_in(ks, 1), (72, 200), jnp.float32)
    c = jax.random.normal(jax.random.fold_in(ks, 2), (24,), jnp.float32)
    got = matmul_bias_act(a, b, c, relu=True, out_dtype=jnp.float32)
    want = jnp.maximum(
        jnp.dot(a.astype(jnp.bfloat16), b.astype(jnp.bfloat16),
                preferred_element_type=jnp.float32) + c[:, None], 0.0)
    assert jnp.allclose(got, want, atol=1e-2, rtol=1e-2), "matmul kernel mismatch"

    # --- sanity check: window reduce --------------------------------------
    pt = jax.random.normal(jax.random.fold_in(ks, 3), (9, 40, 300), jnp.float32)
    assert jnp.allclose(window_reduce(pt, "max"), jnp.max(pt, axis=0), atol=1e-5)
    assert jnp.allclose(window_reduce(pt, "mean"), jnp.mean(pt, axis=0), atol=1e-4)

    # --- sanity check: direct 3x3x3 conv vs lax.conv ----------------------
    def _ref_unit(x, u, stride):
        wf = (u["w"] * u["scale"][:, None, None, None, None]).astype(jnp.bfloat16)
        xb = jnp.transpose(x, (1, 0, 2, 3, 4)).astype(jnp.bfloat16)
        y = lax.conv_general_dilated(
            xb, wf, window_strides=stride, padding="SAME",
            dimension_numbers=("NCDHW", "OIDHW", "NCDHW"),
            preferred_element_type=jnp.float32)
        y = jnp.maximum(y + u["bias"][None, :, None, None, None], 0.0)
        return jnp.transpose(y, (1, 0, 2, 3, 4))

    u3 = _init_unit3d(jax.random.fold_in(ks, 4), 24, 32, (3, 3, 3))
    x3 = jax.random.normal(jax.random.fold_in(ks, 5), (24, 2, 4, 6, 10),
                           jnp.float32)
    got3 = conv3x3x3_s1(x3, _prep_unit_3x3(u3)).astype(jnp.float32)
    assert jnp.allclose(got3, _ref_unit(x3, u3, (1, 1, 1)),
                        atol=8e-2, rtol=6e-2), "direct 3x3x3 conv mismatch"

    u7 = _init_unit3d(jax.random.fold_in(ks, 6), 1, 16, (7, 7, 7))
    x7 = jax.random.normal(jax.random.fold_in(ks, 7), (1, 1, 9, 18, 20),
                           jnp.float32)
    got7 = conv7x7x7_s2_cin1(x7, _prep_unit_conv1a(u7)).astype(jnp.float32)
    assert jnp.allclose(got7, _ref_unit(x7, u7, (2, 2, 2)),
                        atol=8e-2, rtol=6e-2), "direct 7x7x7/s2 conv mismatch"

    # --- full DepthEncoder forward ----------------------------------------
    raw_params = init_depth_encoder_params(kp)
    params = prepare_params(raw_params)   # BN fold / reshape / bf16 cast, once

    # Minimum legal I3D input: H = W = 224 (the fixed (2,7,7) avg-pool needs a
    # 7x7 Mixed_5c) and T >= 9; batch kept at 1 to keep the demo small
    # (batch is folded into the lane axis, so B > 1 also works).
    x = jax.random.normal(kx, (1, 1, 16, 224, 224), jnp.float32)

    fwd = jax.jit(depth_encoder_forward)
    out = jax.block_until_ready(fwd(x, params))
    assert out.shape == (1, 400, 1), out.shape
    assert bool(jnp.all(jnp.isfinite(out)))
    print("KERNEL_OK")
</pallas_src>

<mosaic_0001>
module attributes {stable_mosaic.version = 11 : i64} {
  func.func @_mm_bias_act_kernel(%arg0: i32, %arg1: i32, %arg2: i32, %arg3: memref<32x80xbf16, #tpu.memory_space<vmem>>, %arg4: memref<80x256xbf16, #tpu.memory_space<vmem>>, %arg5: memref<32x1xf32, #tpu.memory_space<vmem>>, %arg6: memref<32x256xf32, #tpu.memory_space<vmem>>, %arg7: memref<32x256xf32, #tpu.memory_space<vmem>>) attributes {dimension_semantics = [#tpu.dimension_semantics<parallel>, #tpu.dimension_semantics<parallel>, #tpu.dimension_semantics<arbitrary>], iteration_bounds = array<i64: 1, 1, 1>, scalar_prefetch = 0 : i64, scratch_operands = 1 : i64, tpu.core_type = #tpu.core_type<tc>, window_params = [{transform_indices = @transform_0, window_bounds = array<i64: 32, 80>}, {transform_indices = @transform_1, window_bounds = array<i64: 80, 256>}, {transform_indices = @transform_2, window_bounds = array<i64: 32, 1>}, {transform_indices = @transform_3, window_bounds = array<i64: 32, 256>}]} {
    %c0_i32 = arith.constant 0 : i32
    %0 = arith.cmpi eq, %arg2, %c0_i32 : i32
    %1 = arith.extui %0 : i1 to i32
    %c0_i32_0 = arith.constant 0 : i32
    %2 = arith.cmpi ne, %1, %c0_i32_0 : i32
    scf.if %2 {
      %cst_10 = arith.constant 0.000000e+00 : f32
      %12 = vector.broadcast %cst_10 : f32 to vector<32x256xf32>
      %c0_11 = arith.constant 0 : index
      %c0_12 = arith.constant 0 : index
      %13 = vector.load %arg7[%c0_11, %c0_12] : memref<32x256xf32, #tpu.memory_space<vmem>>, vector<32x256xf32>
      tpu.vector_store %arg7[%c0_11, %c0_12], %12 {strides = array<i32>} : memref<32x256xf32, #tpu.memory_space<vmem>>, vector<32x256xf32>,
    } else {
    }
    %c0 = arith.constant 0 : index
    %c0_1 = arith.constant 0 : index
    %3 = vector.load %arg7[%c0, %c0_1] : memref<32x256xf32, #tpu.memory_space<vmem>>, vector<32x256xf32>
    %c0_2 = arith.constant 0 : index
    %c0_3 = arith.constant 0 : index
    %4 = vector.load %arg3[%c0_2, %c0_3] : memref<32x80xbf16, #tpu.memory_space<vmem>>, vector<32x80xbf16>
    %c0_4 = arith.constant 0 : index
    %c0_5 = arith.constant 0 : index
    %5 = vector.load %arg4[%c0_4, %c0_5] : memref<80x256xbf16, #tpu.memory_space<vmem>>, vector<80x256xbf16>
    %cst = arith.constant dense<0.000000e+00> : vector<32x256xf32>
    %6 = tpu.matmul %4, %5, %cst {dimension_numbers = #tpu.dot_dimension_numbers<[1], [0], [0], [1], [0, 0, 1, 1], [], []>} : vector<32x80xbf16>, vector<80x256xbf16>, vector<32x256xf32> -> vector<32x256xf32>
    %7 = arith.addf %3, %6 : vector<32x256xf32>
    %c0_6 = arith.constant 0 : index
    %c0_7 = arith.constant 0 : index
    %8 = vector.load %arg7[%c0_6, %c0_7] : memref<32x256xf32, #tpu.memory_space<vmem>>, vector<32x256xf32>
    tpu.vector_store %arg7[%c0_6, %c0_7], %7 {strides = array<i32>} : memref<32x256xf32, #tpu.memory_space<vmem>>, vector<32x256xf32>,
    %c0_i32_8 = arith.constant 0 : i32
    %9 = arith.cmpi eq, %arg2, %c0_i32_8 : i32
    %10 = arith.extui %9 : i1 to i32
    %c0_i32_9 = arith.constant 0 : i32
    %11 = arith.cmpi ne, %10, %c0_i32_9 : i32
    scf.if %11 {
      %c0_10 = arith.constant 0 : index
      %c0_11 = arith.constant 0 : index
      %12 = vector.load %arg7[%c0_10, %c0_11] : memref<32x256xf32, #tpu.memory_space<vmem>>, vector<32x256xf32>
      %c0_12 = arith.constant 0 : index
      %c0_13 = arith.constant 0 : index
      %13 = vector.load %arg5[%c0_12, %c0_13] : memref<32x1xf32, #tpu.memory_space<vmem>>, vector<32x1xf32>
      %14 = vector.broadcast %13 : vector<32x1xf32> to vector<32x256xf32>
      %15 = arith.addf %12, %14 : vector<32x256xf32>
      %cst_14 = arith.constant 0.000000e+00 : f32
      %16 = vector.broadcast %cst_14 : f32 to vector<32x256xf32>
      %17 = arith.maximumf %15, %16 : vector<32x256xf32>
      %c0_15 = arith.constant 0 : index
      %c0_16 = arith.constant 0 : index
      %18 = vector.load %arg6[%c0_15, %c0_16] : memref<32x256xf32, #tpu.memory_space<vmem>>, vector<32x256xf32>
      tpu.vector_store %arg6[%c0_15, %c0_16], %17 {strides = array<i32>} : memref<32x256xf32, #tpu.memory_space<vmem>>, vector<32x256xf32>,
    } else {
    }
    return
  }
  func.func @transform_0(%arg0: i32, %arg1: i32, %arg2: i32) -> (i32, i32) {
    %c0_i32 = arith.constant 0 : i32
    return %arg0, %arg2 : i32, i32
  }
  func.func @transform_1(%arg0: i32, %arg1: i32, %arg2: i32) -> (i32, i32) {
    %c0_i32 = arith.constant 0 : i32
    return %arg2, %arg1 : i32, i32
  }
  func.func @transform_2(%arg0: i32, %arg1: i32, %arg2: i32) -> (i32, i32) {
    %c0_i32 = arith.constant 0 : i32
    %c0_i32_0 = arith.constant 0 : i32
    return %arg0, %c0_i32 : i32, i32
  }
  func.func @transform_3(%arg0: i32, %arg1: i32, %arg2: i32) -> (i32, i32) {
    %c0_i32 = arith.constant 0 : i32
    return %arg0, %arg1 : i32, i32
  }
}

</mosaic_0001>

<llo_original>
// kernel: tpu_custom_call.1
$region0: #{tpu_custom_call.1}
  #allocation0 [shape = 'u32[]', space=smem, size = 0x4, offset = 0x4, fixed_abs, tag = 'smem constant byte address 0x4 - core index']
  #allocation1 [shape = 'u32[144,128]{1,0:T(1,128)}', space=vmem, size = 0x12000, scoped, tag = 'internal scratch']
  #allocation2 [shape = 'f32[32,256]{1,0:T(8,128)}', space=vmem, size = 0x8000, scoped, tag = 'scratch operand']
  %s0 = inlined_call_operand.vmem [shape: bf16[32,80], index: 0, kind: input, shape index: {}]
  %s1 = inlined_call_operand.hbm [shape: bf16[80,256], index: 1, kind: input, shape index: {}]
  %s2 = inlined_call_operand.vmem [shape: f32[32,1], index: 2, kind: input, shape index: {}]
  %s3 = inlined_call_operand.hbm [shape: f32[32,256], index: 3, kind: output, shape index: {}]
  %s4 = sld [smem:[#allocation0]]
  $region34: #{tpu_custom_call.1} parent=0
    _
  %s6 = ssub.s32 1, %s4
  %s7 = scalar_select 0, %s6, %s4
  $region1: #{tpu_custom_call.1} parent=0
    #allocation3 [shape = 'u8[40960]{0}', space=vmem, size = 0xa000, scoped, tag = 'input window, operand 1, single buffered']
    #allocation4 [shape = 's32[1]{0}', space=sflag, size = 0x4, scoped, tag = 'scoped memory for tpu_custom_call.1']
    #allocation5 [shape = 's32[1]{0}', space=sflag, size = 0x4, scoped, tag = 'scoped memory for tpu_custom_call.1']
    #allocation6 [shape = 'u8[32768]{0}', space=vmem, size = 0x8000, scoped, tag = 'output window, operand 0, single buffered']
    %8 = vsyncpa [#allocation4], 0
    %9 = vsyncpa [#allocation5], 0
    // Predicated region
    $region2: #{tpu_custom_call.1} parent=1 // pred_check
      _
    $region3: #{tpu_custom_call.1} parent=1 // pred_check_branch
      %11 = sbr.rel (0) target = $region5
    $region4: #{tpu_custom_call.1} parent=1 // pred_region
      _
    $region5: #{tpu_custom_call.1} parent=1 // pred_fallthru
      _
    // Predicated region
    $region6: #{tpu_custom_call.1} parent=1 // pred_check
      _
    $region7: #{tpu_custom_call.1} parent=1 // pred_check_branch
      %13 = sbr.rel (0) target = $region9
    $region8: #{tpu_custom_call.1} parent=1 // pred_region
      %s15 = ssub.s32 1280, 1280
      %16 = vsyncadd [#allocation4], %s15
      %s17 = sshll.u32 [#allocation3], 4
      %s18 = int_to_ptr.vmem [resolvable:$true] %s17
      %23 = dma.hbm_to_vmem [thread:$0]  %s1, 1280, %s18, [#allocation4], 128, 128, 8
    $region9: #{tpu_custom_call.1} parent=1 // pred_fallthru
      _
    // Predicated region
    $region10: #{tpu_custom_call.1} parent=1 // pred_check
      _
    $region11: #{tpu_custom_call.1} parent=1 // pred_check_branch
      %25 = sbr.rel (0) target = $region13
    $region12: #{tpu_custom_call.1} parent=1 // pred_region
      _
    $region13: #{tpu_custom_call.1} parent=1 // pred_fallthru
      _
    // Predicated region
    $region14: #{tpu_custom_call.1} parent=1 // pred_check
      _
    $region15: #{tpu_custom_call.1} parent=1 // pred_check_branch
      %27 = sbr.rel (0) target = $region17
    $region16: #{tpu_custom_call.1} parent=1 // pred_region
      %28 = dma.done [#allocation4], 1280
    $region17: #{tpu_custom_call.1} parent=1 // pred_fallthru
      _
    %p30 = scmp.eq.s32.totalorder 0, 0
    // Predicated region
    $region18: #{tpu_custom_call.1} parent=1 // pred_check
      %p31 = pneg %p30
    $region19: #{tpu_custom_call.1} parent=1 // pred_check_branch
      %33 = sbr.rel (%p31) target = $region21
    $region20: #{tpu_custom_call.1} parent=1 // pred_region
      %34 = vst [vmem:[#allocation2] sm:$0xff] 0.0
      %35 = vst [vmem:[#allocation2 + $0x8] sm:$0xff] 0.0
      %36 = vst [vmem:[#allocation2 + $0x10] sm:$0xff] 0.0
      %37 = vst [vmem:[#allocation2 + $0x18] sm:$0xff] 0.0
      %38 = vst [vmem:[#allocation2 + $0x20] sm:$0xff] 0.0
      %39 = vst [vmem:[#allocation2 + $0x28] sm:$0xff] 0.0
      %40 = vst [vmem:[#allocation2 + $0x30] sm:$0xff] 0.0
      %41 = vst [vmem:[#allocation2 + $0x38] sm:$0xff] 0.0
    $region21: #{tpu_custom_call.1} parent=1 // pred_fallthru
      _
    %v42 = vld [vmem:[#allocation2] sm:$0xff]
    %v43 = vld [vmem:[#allocation2 + $0x8] sm:$0xff]
    %v44 = vld [vmem:[#allocation2 + $0x10] sm:$0xff]
    %v45 = vld [vmem:[#allocation2 + $0x18] sm:$0xff]
    %v46 = vld [vmem:[#allocation2 + $0x20] sm:$0xff]
    %v47 = vld [vmem:[#allocation2 + $0x28] sm:$0xff]
    %v48 = vld [vmem:[#allocation2 + $0x30] sm:$0xff]
    %v49 = vld [vmem:[#allocation2 + $0x38] sm:$0xff]
    %v50 = vld [vmem:[%s0] sm:$0xf]
    %v51 = vld [vmem:[%s0 + $0x4] sm:$0xf]
    %v52 = vld [vmem:[%s0 + $0x8] sm:$0xf]
    %v53 = vld [vmem:[%s0 + $0xc] sm:$0xf]
    %v54 = vld [vmem:[#allocation3] sm:$0xff]
    %v55 = vld [vmem:[#allocation3 + $0x8] sm:$0xff]
    %v56 = vld [vmem:[#allocation3 + $0x10] sm:$0xff]
    %v57 = vld [vmem:[#allocation3 + $0x18] sm:$0xff]
    %v58 = vld [vmem:[#allocation3 + $0x20] sm:$0xff]
    %v59 = vld [vmem:[#allocation3 + $0x28] sm:$0xff]
    %v60 = vld [vmem:[#allocation3 + $0x30] sm:$0xff]
    %v61 = vld [vmem:[#allocation3 + $0x38] sm:$0xff]
    %v62 = vld [vmem:[#allocation3 + $0x40] sm:$0xff]
    %v63 = vld [vmem:[#allocation3 + $0x48] sm:$0xff]
    %v68 = vunpack.c.l.b16 %v50
    %v69 = vunpack.c.l.b16 %v51
    %v70 = vunpack.c.l.b16 %v52
    %v71 = vunpack.c.l.b16 %v53
    %v72 = vpack.c.b16 %v69, %v68
    %v73 = vpack.c.b16 %v71, %v70
    %v84 = vunpack.c.l.b16 %v54
    %v85 = vunpack.c.h.b16 %v54
    %v86 = vunpack.c.l.b16 %v55
    %v87 = vunpack.c.h.b16 %v55
    %v88 = vunpack.c.l.b16 %v56
    %v89 = vunpack.c.h.b16 %v56
    %v90 = vunpack.c.l.b16 %v57
    %v91 = vunpack.c.h.b16 %v57
    %v92 = vunpack.c.l.b16 %v58
    %v93 = vunpack.c.h.b16 %v58
    %v94 = vunpack.c.l.b16 %v59
    %v95 = vunpack.c.h.b16 %v59
    %v96 = vunpack.c.l.b16 %v60
    %v97 = vunpack.c.h.b16 %v60
    %v98 = vunpack.c.l.b16 %v61
    %v99 = vunpack.c.h.b16 %v61
    %v100 = vunpack.c.l.b16 %v62
    %v101 = vunpack.c.h.b16 %v62
    %v102 = vunpack.c.l.b16 %v63
    %v103 = vunpack.c.h.b16 %v63
    %v104 = vpack.c.b16 %v86, %v84
    %v105 = vpack.c.b16 %v87, %v85
    %v106 = vpack.c.b16 %v90, %v88
    %v107 = vpack.c.b16 %v91, %v89
    %v108 = vpack.c.b16 %v94, %v92
    %v109 = vpack.c.b16 %v95, %v93
    %v110 = vpack.c.b16 %v98, %v96
    %v111 = vpack.c.b16 %v99, %v97
    %v112 = vpack.c.b16 %v102, %v100
    %v113 = vpack.c.b16 %v103, %v101
    %vm124 = vcmask 654336
    %v126 = vsel %vm124, %v72, 0
    %v129 = vsel %vm124, %v73, 0
    %131 = vmatprep.subr.bf16.mxu0 %v105
    %132 = vmatpush1.bf16.msra.mxu0 %v104
    %133 = vmatprep.subr.bf16.mxu0 %v107
    %134 = vmatpush1.bf16.msra.mxu0 %v106
    %135 = vmatprep.subr.bf16.mxu0 %v109
    %136 = vmatpush1.bf16.msra.mxu0 %v108
    %137 = vmatprep.subr.bf16.mxu0 %v111
    %138 = vmatpush1.bf16.msra.mxu0 %v110
    %139 = vmatprep.subr.bf16.mxu0 %v113
    %140 = vmatpush1.bf16.msra.mxu0 %v112
    %141 = vmatprep.subr.bf16.mxu0 0
    %142 = vmatpush1.bf16.msra.mxu0 0
    %143 = vmatprep.subr.bf16.mxu0 0
    %144 = vmatpush1.bf16.msra.mxu0 0
    %145 = vmatprep.subr.bf16.mxu0 0
    %146 = vmatpush1.bf16.msra.mxu0 0
    %147 = vmatprep.subr.bf16.mxu0 0
    %148 = vmatpush1.bf16.msra.mxu0 0
    %149 = vmatprep.subr.bf16.mxu0 0
    %150 = vmatpush1.bf16.msra.mxu0 0
    %151 = vmatprep.subr.bf16.mxu0 0
    %152 = vmatpush1.bf16.msra.mxu0 0
    %153 = vmatprep.subr.bf16.mxu0 0
    %154 = vmatpush1.bf16.msra.mxu0 0
    %155 = vmatprep.subr.bf16.mxu0 0
    %156 = vmatpush1.bf16.msra.mxu0 0
    %157 = vmatprep.subr.bf16.mxu0 0
    %158 = vmatpush1.bf16.msra.mxu0 0
    %159 = vmatprep.subr.bf16.mxu0 0
    %160 = vmatpush1.bf16.msra.mxu0 0
    %161 = vmatprep.subr.bf16.mxu0 0
    %162 = vmatpush1.bf16.msra.mxu0 0
    %163 = vmatprep.mubr.bf16.mxu0 0
    %164 = vmatmul.mubr.bf16.gmra.mrb[0].mxu0 %v126
    %v165 = vpop.f32.mrb[0].mxu0
    %v166 = vadd.f32 0.0, %v165
    %v167 = vpop.f32.mrb[0].mxu0
    %v168 = vadd.f32 0.0, %v167
    %v169 = vpop.f32.mrb[0].mxu0
    %v170 = vadd.f32 0.0, %v169
    %v171 = vpop.f32.mrb[0].mxu0
    %v172 = vadd.f32 0.0, %v171
    %173 = vmatprep.mubr.bf16.mxu0 0
    %174 = vmatmul.mubr.bf16.gmra.mrb[0].mxu0 %v129
    %v175 = vpop.f32.mrb[0].mxu0
    %v176 = vadd.f32 0.0, %v175
    %v177 = vpop.f32.mrb[0].mxu0
    %v178 = vadd.f32 0.0, %v177
    %v179 = vpop.f32.mrb[0].mxu0
    %v180 = vadd.f32 0.0, %v179
    %v181 = vpop.f32.mrb[0].mxu0
    %v182 = vadd.f32 0.0, %v181
    %183 = vdwg.mxu0
    %v184 = vadd.f32 %v42, %v166
    %v185 = vadd.f32 %v43, %v168
    %v186 = vadd.f32 %v44, %v170
    %v187 = vadd.f32 %v45, %v172
    %v188 = vadd.f32 %v46, %v176
    %v189 = vadd.f32 %v47, %v178
    %v190 = vadd.f32 %v48, %v180
    %v191 = vadd.f32 %v49, %v182
    %192 = vst [vmem:[#allocation2] sm:$0xff] %v184
    %193 = vst [vmem:[#allocation2 + $0x8] sm:$0xff] %v185
    %194 = vst [vmem:[#allocation2 + $0x10] sm:$0xff] %v186
    %195 = vst [vmem:[#allocation2 + $0x18] sm:$0xff] %v187
    %196 = vst [vmem:[#allocation2 + $0x20] sm:$0xff] %v188
    %197 = vst [vmem:[#allocation2 + $0x28] sm:$0xff] %v189
    %198 = vst [vmem:[#allocation2 + $0x30] sm:$0xff] %v190
    %199 = vst [vmem:[#allocation2 + $0x38] sm:$0xff] %v191
    // Predicated region
    $region22: #{tpu_custom_call.1} parent=1 // pred_check
      %p200 = pneg %p30
    $region23: #{tpu_custom_call.1} parent=1 // pred_check_branch
      %202 = sbr.rel (%p200) target = $region25
    $region24: #{tpu_custom_call.1} parent=1 // pred_region
      %v203 = vld [vmem:[#allocation2] sm:$0xff]
      %v204 = vld [vmem:[#allocation2 + $0x8] sm:$0xff]
      %v205 = vld [vmem:[#allocation2 + $0x10] sm:$0xff]
      %v206 = vld [vmem:[#allocation2 + $0x18] sm:$0xff]
      %v207 = vld [vmem:[#allocation2 + $0x20] sm:$0xff]
      %v208 = vld [vmem:[#allocation2 + $0x28] sm:$0xff]
      %v209 = vld [vmem:[#allocation2 + $0x30] sm:$0xff]
      %v210 = vld [vmem:[#allocation2 + $0x38] sm:$0xff]
      %v211 = vld [vmem:[%s2] sm:$0xff]
      %v212 = vld [vmem:[%s2 + $0x8] sm:$0xff]
      %v213 = vld [vmem:[%s2 + $0x10] sm:$0xff]
      %v214 = vld [vmem:[%s2 + $0x18] sm:$0xff]
      %216 = vset.pattern.permute.xlu0 0
      %217 = vperm.xlu0 %216, %v211
      %v218 = vpop.permute.xlu0 %217
      %221 = vset.pattern.permute.xlu0 0
      %222 = vperm.xlu0 %221, %v212
      %v223 = vpop.permute.xlu0 %222
      %226 = vset.pattern.permute.xlu0 0
      %227 = vperm.xlu0 %226, %v213
      %v228 = vpop.permute.xlu0 %227
      %231 = vset.pattern.permute.xlu0 0
      %232 = vperm.xlu0 %231, %v214
      %v233 = vpop.permute.xlu0 %232
      %v235 = vadd.f32 %v203, %v218
      %v236 = vadd.f32 %v204, %v218
      %v237 = vadd.f32 %v205, %v223
      %v238 = vadd.f32 %v206, %v223
      %v239 = vadd.f32 %v207, %v228
      %v240 = vadd.f32 %v208, %v228
      %v241 = vadd.f32 %v209, %v233
      %v242 = vadd.f32 %v210, %v233
      %v243 = vmax.f32 %v235, 0.0
      %v244 = vmax.f32 %v236, 0.0
      %v245 = vmax.f32 %v237, 0.0
      %v246 = vmax.f32 %v238, 0.0
      %v247 = vmax.f32 %v239, 0.0
      %v248 = vmax.f32 %v240, 0.0
      %v249 = vmax.f32 %v241, 0.0
      %v250 = vmax.f32 %v242, 0.0
      %251 = vst [vmem:[#allocation6] sm:$0xff] %v243
      %252 = vst [vmem:[#allocation6 + $0x8] sm:$0xff] %v244
      %253 = vst [vmem:[#allocation6 + $0x10] sm:$0xff] %v245
      %254 = vst [vmem:[#allocation6 + $0x18] sm:$0xff] %v246
      %255 = vst [vmem:[#allocation6 + $0x20] sm:$0xff] %v247
      %256 = vst [vmem:[#allocation6 + $0x28] sm:$0xff] %v248
      %257 = vst [vmem:[#allocation6 + $0x30] sm:$0xff] %v249
      %258 = vst [vmem:[#allocation6 + $0x38] sm:$0xff] %v250
    $region25: #{tpu_custom_call.1} parent=1 // pred_fallthru
      _
    // Predicated region
    $region26: #{tpu_custom_call.1} parent=1 // pred_check
      _
    $region27: #{tpu_custom_call.1} parent=1 // pred_check_branch
      %260 = sbr.rel (0) target = $region29
    $region28: #{tpu_custom_call.1} parent=1 // pred_region
      %s262 = ssub.s32 1024, 1024
      %263 = vsyncadd [#allocation5], %s262
      %s264 = sshll.u32 [#allocation6], 4
      %s265 = int_to_ptr.vmem [resolvable:$true] %s264
      %270 = dma.vmem_to_hbm [thread:$0]  %s265, 1024, %s3, [#allocation5], 256, 256, 16
    $region29: #{tpu_custom_call.1} parent=1 // pred_fallthru
      _
    // Predicated region
    $region30: #{tpu_custom_call.1} parent=1 // pred_check
      _
    $region31: #{tpu_custom_call.1} parent=1 // pred_check_branch
      %272 = sbr.rel (0) target = $region33
    $region32: #{tpu_custom_call.1} parent=1 // pred_region
      %273 = dma.done [#allocation5], 1024
    $region33: #{tpu_custom_call.1} parent=1 // pred_fallthru
      _
    %274 = vsyncpa [#allocation4], 1
    %275 = vsyncpa [#allocation5], 1

</llo_original>
